<compile_context>
chip_gen: v5e
topology: v5e:2x2
jax: 0.10.0
libtpu: 0.0.40
codegen_flags: <defaults>
</compile_context>

<pallas_src>
import functools

import jax
import jax.numpy as jnp
from jax.experimental import pallas as pl
from jax.experimental.pallas import tpu as pltpu

# LIF neuron hyper-parameters (deterministic, fixed in-script)
BETA = 0.9          # membrane decay
V_THRESHOLD = 1.0   # spiking threshold


def _round_up(x, m):
    return ((x + m - 1) // m) * m


def spiking_layer_kernel(x_ref, wt_ref, v_ref, spk_ref, vout_ref, acc_ref):
    """Fused synapse (tiled MXU matmul) + LIF neuron (elementwise threshold).

    Grid = (B/tm, OUT/tn, IN/tk); IN (k) is the reduction axis ("arbitrary").

    x_ref:    [tm, tk]  input spikes tile (bf16)
    wt_ref:   [tk, tn]  transposed synapse weight tile (bf16)
    v_ref:    [tm, tn]  previous membrane potential tile (f32)
    spk_ref:  [tm, tn]  output spikes tile (f32)
    vout_ref: [tm, tn]  updated (soft-reset) membrane potential tile (f32, aliases v_mem)
    acc_ref:  [tm, tn]  f32 VMEM accumulator (scratch)
    """
    k = pl.program_id(2)

    @pl.when(k == 0)
    def _init():
        acc_ref[...] = jnp.zeros_like(acc_ref)

    # Synaptic current partial sum: bf16 x bf16 -> f32 accumulation on the MXU.
    acc_ref[...] += jnp.dot(
        x_ref[...], wt_ref[...], preferred_element_type=jnp.float32
    )

    @pl.when(k == pl.num_programs(2) - 1)
    def _finalize():
        # LIF membrane update + threshold (VPU elementwise) on the resident (tm, tn) tile.
        v_new = BETA * v_ref[...] + acc_ref[...]
        spikes = jnp.where(v_new >= V_THRESHOLD, 1.0, 0.0)
        spk_ref[...] = spikes.astype(spk_ref.dtype)
        # Soft-reset membrane state for the recurrence (extra output, written in place).
        vout_ref[...] = (v_new - spikes * V_THRESHOLD).astype(vout_ref.dtype)


def prepare_weight(weight):
    """One-time (init-time) conversion: PyTorch [OUT, IN] f32 -> kernel layout [IN, OUT] bf16."""
    return weight.T.astype(jnp.bfloat16)


@functools.partial(jax.jit, static_argnames=("tm", "tn", "tk"))
def spiking_layer_forward(input_spikes, wt, v_mem, tm=128, tn=512, tk=512):
    """Fused SpikingLayer forward.

    input_spikes: [B, IN]   (any float dtype; cast to bf16 — spikes are exactly 0/1)
    wt:           [IN, OUT] bf16, pre-transposed once via prepare_weight()
    v_mem:        [B, OUT]  f32 membrane state

    Returns (spikes [B, OUT] f32, v_new [B, OUT] f32).
    Default tiles (128, 512, 512) keep the double-buffered working set at ~2 MiB,
    well inside v7x's 64 MiB VMEM; the mins below shrink them for small layers.
    """
    B, IN = input_spikes.shape
    IN_w, OUT = wt.shape
    assert IN == IN_w, "weight/input feature mismatch"

    # Clamp tiles to (padded) problem size; keep lane dims multiples of 128, sublane of 8.
    tm = min(tm, _round_up(B, 8))
    tn = min(tn, _round_up(OUT, 128))
    tk = min(tk, _round_up(IN, 128))

    Bp = _round_up(B, tm)
    OUTp = _round_up(OUT, tn)
    INp = _round_up(IN, tk)

    x = input_spikes.astype(jnp.bfloat16)
    if (Bp, INp) != (B, IN):
        x = jnp.pad(x, ((0, Bp - B), (0, INp - IN)))          # zero pads: no dot contribution
    w = wt
    if (INp, OUTp) != (IN, OUT):
        w = jnp.pad(w, ((0, INp - IN), (0, OUTp - OUT)))
    v = v_mem
    if (Bp, OUTp) != (B, OUT):
        v = jnp.pad(v, ((0, Bp - B), (0, OUTp - OUT)))

    grid = (Bp // tm, OUTp // tn, INp // tk)

    spikes, v_new = pl.pallas_call(
        spiking_layer_kernel,
        out_shape=(
            jax.ShapeDtypeStruct((Bp, OUTp), jnp.float32),   # spikes (module return)
            jax.ShapeDtypeStruct((Bp, OUTp), jnp.float32),   # updated membrane state
        ),
        grid_spec=pltpu.PrefetchScalarGridSpec(
            num_scalar_prefetch=0,
            grid=grid,
            in_specs=[
                pl.BlockSpec((tm, tk), lambda i, j, k: (i, k)),   # x
                pl.BlockSpec((tk, tn), lambda i, j, k: (k, j)),   # W.T
                pl.BlockSpec((tm, tn), lambda i, j, k: (i, j)),   # v_mem
            ],
            out_specs=(
                pl.BlockSpec((tm, tn), lambda i, j, k: (i, j)),   # spikes
                pl.BlockSpec((tm, tn), lambda i, j, k: (i, j)),   # v_new (aliases v_mem)
            ),
            scratch_shapes=[pltpu.VMEM((tm, tn), jnp.float32)],
        ),
        compiler_params=pltpu.CompilerParams(
            dimension_semantics=("parallel", "parallel", "arbitrary"),
            vmem_limit_bytes=32 * 1024 * 1024,
        ),
        input_output_aliases={2: 1},   # v_mem (input 2) written in place as v_new (output 1)
    )(x, w, v)

    return spikes[:B, :OUT], v_new[:B, :OUT]


if __name__ == "__main__":
    key = jax.random.PRNGKey(0)
    k_x, k_w = jax.random.split(key)

    # Small but grid-exercising shapes: IN=320 pads to 384 (3 k-steps at tk=128),
    # OUT=512 splits into 2 lane-dense j-tiles at tn=256.
    B, IN, OUT = 8, 320, 512

    # Binary input spikes (Bernoulli 0/1), as a spiking network would receive.
    input_spikes = (jax.random.uniform(k_x, (B, IN)) < 0.3).astype(jnp.float32)
    # Deterministic synapse weight, PyTorch layout [OUT, IN].
    weight = jax.random.normal(k_w, (OUT, IN), dtype=jnp.float32) * 0.1
    # Membrane potential state starts at zero (fresh reset_state()).
    v_mem = jnp.zeros((B, OUT), dtype=jnp.float32)

    # One-time weight prep (transpose + bf16 cast happens once, not per forward call).
    wt = prepare_weight(weight)

    # Small tiles chosen explicitly for the toy shapes so the k-accumulation path is exercised.
    spikes, v_new = spiking_layer_forward(input_spikes, wt, v_mem, tm=8, tn=256, tk=128)
    spikes = jax.block_until_ready(spikes)
    v_new = jax.block_until_ready(v_new)

    # Reference with matching numerics (bf16 operands, f32 accumulation).
    current_ref = jnp.dot(
        input_spikes.astype(jnp.bfloat16),
        weight.T.astype(jnp.bfloat16),
        preferred_element_type=jnp.float32,
    )
    v_ref = BETA * v_mem + current_ref
    spikes_ref = (v_ref >= V_THRESHOLD).astype(jnp.float32)
    v_new_ref = v_ref - spikes_ref * V_THRESHOLD

    assert spikes.shape == (B, OUT) and v_new.shape == (B, OUT)
    assert bool(jnp.all((spikes == 0.0) | (spikes == 1.0)))

    # Tolerance-aware spike check: accumulation-order rounding can legitimately flip
    # spikes whose membrane value sits within ~1e-4 of the threshold.
    near_threshold = jnp.abs(v_ref - V_THRESHOLD) < 1e-4
    spike_mismatch = (spikes != spikes_ref) & (~near_threshold)
    assert not bool(jnp.any(spike_mismatch))

    # Membrane state check (excluding near-threshold positions where a flip shifts it by V_TH).
    v_ok = jnp.where(near_threshold, True, jnp.abs(v_new - v_new_ref) < 1e-3)
    assert bool(jnp.all(v_ok))

    # Sanity: bf16-operand membrane is close to the full-f32 math.
    v_f32 = BETA * v_mem + input_spikes @ weight.T
    assert bool(jnp.allclose(v_ref, v_f32, atol=3e-2, rtol=3e-2))

    print("KERNEL_OK")
</pallas_src>

<mosaic_0001>
module attributes {stable_mosaic.version = 11 : i64} {
  func.func @spiking_layer_kernel(%arg0: i32, %arg1: i32, %arg2: i32, %arg3: memref<8x128xbf16, #tpu.memory_space<vmem>>, %arg4: memref<128x256xbf16, #tpu.memory_space<vmem>>, %arg5: memref<8x256xf32, #tpu.memory_space<vmem>>, %arg6: memref<8x256xf32, #tpu.memory_space<vmem>>, %arg7: memref<8x256xf32, #tpu.memory_space<vmem>>, %arg8: memref<8x256xf32, #tpu.memory_space<vmem>>) attributes {dimension_semantics = [#tpu.dimension_semantics<parallel>, #tpu.dimension_semantics<parallel>, #tpu.dimension_semantics<arbitrary>], iteration_bounds = array<i64: 1, 2, 3>, scalar_prefetch = 0 : i64, scratch_operands = 1 : i64, tpu.core_type = #tpu.core_type<tc>, window_params = [{transform_indices = @transform_0, window_bounds = array<i64: 8, 128>}, {transform_indices = @transform_1, window_bounds = array<i64: 128, 256>}, {transform_indices = @transform_2, window_bounds = array<i64: 8, 256>}, {transform_indices = @transform_3, window_bounds = array<i64: 8, 256>}, {transform_indices = @transform_4, window_bounds = array<i64: 8, 256>}]} {
    %c0_i32 = arith.constant 0 : i32
    %0 = arith.cmpi eq, %arg2, %c0_i32 : i32
    %1 = arith.extui %0 : i1 to i32
    %c0_i32_0 = arith.constant 0 : i32
    %2 = arith.cmpi ne, %1, %c0_i32_0 : i32
    scf.if %2 {
      %cst_9 = arith.constant 0.000000e+00 : f32
      %12 = vector.broadcast %cst_9 : f32 to vector<8x256xf32>
      %c0_10 = arith.constant 0 : index
      %c0_11 = arith.constant 0 : index
      %13 = vector.load %arg8[%c0_10, %c0_11] : memref<8x256xf32, #tpu.memory_space<vmem>>, vector<8x256xf32>
      tpu.vector_store %arg8[%c0_10, %c0_11], %12 {strides = array<i32>} : memref<8x256xf32, #tpu.memory_space<vmem>>, vector<8x256xf32>,
    } else {
    }
    %c0 = arith.constant 0 : index
    %c0_1 = arith.constant 0 : index
    %3 = vector.load %arg8[%c0, %c0_1] : memref<8x256xf32, #tpu.memory_space<vmem>>, vector<8x256xf32>
    %c0_2 = arith.constant 0 : index
    %c0_3 = arith.constant 0 : index
    %4 = vector.load %arg3[%c0_2, %c0_3] : memref<8x128xbf16, #tpu.memory_space<vmem>>, vector<8x128xbf16>
    %c0_4 = arith.constant 0 : index
    %c0_5 = arith.constant 0 : index
    %5 = vector.load %arg4[%c0_4, %c0_5] : memref<128x256xbf16, #tpu.memory_space<vmem>>, vector<128x256xbf16>
    %cst = arith.constant dense<0.000000e+00> : vector<8x256xf32>
    %6 = tpu.matmul %4, %5, %cst {dimension_numbers = #tpu.dot_dimension_numbers<[1], [0], [0], [1], [0, 0, 1, 1], [], []>} : vector<8x128xbf16>, vector<128x256xbf16>, vector<8x256xf32> -> vector<8x256xf32>
    %7 = arith.addf %3, %6 : vector<8x256xf32>
    %c0_6 = arith.constant 0 : index
    %c0_7 = arith.constant 0 : index
    %8 = vector.load %arg8[%c0_6, %c0_7] : memref<8x256xf32, #tpu.memory_space<vmem>>, vector<8x256xf32>
    tpu.vector_store %arg8[%c0_6, %c0_7], %7 {strides = array<i32>} : memref<8x256xf32, #tpu.memory_space<vmem>>, vector<8x256xf32>,
    %c2_i32 = arith.constant 2 : i32
    %9 = arith.cmpi eq, %arg2, %c2_i32 : i32
    %10 = arith.extui %9 : i1 to i32
    %c0_i32_8 = arith.constant 0 : i32
    %11 = arith.cmpi ne, %10, %c0_i32_8 : i32
    scf.if %11 {
      %c0_9 = arith.constant 0 : index
      %c0_10 = arith.constant 0 : index
      %12 = vector.load %arg5[%c0_9, %c0_10] : memref<8x256xf32, #tpu.memory_space<vmem>>, vector<8x256xf32>
      %cst_11 = arith.constant 0.899999976 : f32
      %13 = vector.broadcast %cst_11 : f32 to vector<8x256xf32>
      %14 = arith.mulf %13, %12 : vector<8x256xf32>
      %c0_12 = arith.constant 0 : index
      %c0_13 = arith.constant 0 : index
      %15 = vector.load %arg8[%c0_12, %c0_13] : memref<8x256xf32, #tpu.memory_space<vmem>>, vector<8x256xf32>
      %16 = arith.addf %14, %15 : vector<8x256xf32>
      %cst_14 = arith.constant 1.000000e+00 : f32
      %17 = vector.broadcast %cst_14 : f32 to vector<8x256xf32>
      %18 = arith.cmpf oge, %16, %17 : vector<8x256xf32>
      %cst_15 = arith.constant 1.000000e+00 : f32
      %cst_16 = arith.constant 0.000000e+00 : f32
      %19 = vector.broadcast %cst_15 : f32 to vector<8x256xf32>
      %20 = vector.broadcast %cst_16 : f32 to vector<8x256xf32>
      %21 = arith.select %18, %19, %20 : vector<8x256xi1>, vector<8x256xf32>
      %c0_17 = arith.constant 0 : index
      %c0_18 = arith.constant 0 : index
      %22 = vector.load %arg6[%c0_17, %c0_18] : memref<8x256xf32, #tpu.memory_space<vmem>>, vector<8x256xf32>
      tpu.vector_store %arg6[%c0_17, %c0_18], %21 {strides = array<i32>} : memref<8x256xf32, #tpu.memory_space<vmem>>, vector<8x256xf32>,
      %cst_19 = arith.constant 1.000000e+00 : f32
      %23 = vector.broadcast %cst_19 : f32 to vector<8x256xf32>
      %24 = arith.mulf %21, %23 : vector<8x256xf32>
      %25 = arith.subf %16, %24 : vector<8x256xf32>
      %c0_20 = arith.constant 0 : index
      %c0_21 = arith.constant 0 : index
      %26 = vector.load %arg7[%c0_20, %c0_21] : memref<8x256xf32, #tpu.memory_space<vmem>>, vector<8x256xf32>
      tpu.vector_store %arg7[%c0_20, %c0_21], %25 {strides = array<i32>} : memref<8x256xf32, #tpu.memory_space<vmem>>, vector<8x256xf32>,
    } else {
    }
    return
  }
  func.func @transform_0(%arg0: i32, %arg1: i32, %arg2: i32) -> (i32, i32) {
    %c0_i32 = arith.constant 0 : i32
    return %arg0, %arg2 : i32, i32
  }
  func.func @transform_1(%arg0: i32, %arg1: i32, %arg2: i32) -> (i32, i32) {
    %c0_i32 = arith.constant 0 : i32
    return %arg2, %arg1 : i32, i32
  }
  func.func @transform_2(%arg0: i32, %arg1: i32, %arg2: i32) -> (i32, i32) {
    %c0_i32 = arith.constant 0 : i32
    return %arg0, %arg1 : i32, i32
  }
  func.func @transform_3(%arg0: i32, %arg1: i32, %arg2: i32) -> (i32, i32) {
    %c0_i32 = arith.constant 0 : i32
    return %arg0, %arg1 : i32, i32
  }
  func.func @transform_4(%arg0: i32, %arg1: i32, %arg2: i32) -> (i32, i32) {
    %c0_i32 = arith.constant 0 : i32
    return %arg0, %arg1 : i32, i32
  }
}

</mosaic_0001>

<llo_original>
// kernel: spiking_layer_forward.1
$region0: #{spiking_layer_forward.1}
  #allocation0 [shape = 'u32[]', space=smem, size = 0x4, offset = 0x4, fixed_abs, tag = 'smem constant byte address 0x4 - core index']
  #allocation1 [shape = 'u32[72,128]{1,0:T(1,128)}', space=vmem, size = 0x9000, scoped, tag = 'internal scratch']
  #allocation2 [shape = 'f32[8,256]{1,0:T(8,128)}', space=vmem, size = 0x2000, scoped, tag = 'scratch operand']
  %s0 = inlined_call_operand.vmem [shape: bf16[8,384], index: 0, kind: input, shape index: {}]
  %s1 = inlined_call_operand.vmem [shape: bf16[384,512], index: 1, kind: input, shape index: {}]
  %s2 = inlined_call_operand.hbm [shape: f32[8,512], index: 2, kind: input, shape index: {}, may-alias: {2,4}]
  %s3 = inlined_call_operand.hbm [shape: f32[8,512], index: 3, kind: output, shape index: {0}]
  %s4 = inlined_call_operand.hbm [shape: f32[8,512], index: 4, kind: output, shape index: {1}, may-alias: {2,4}]
  %5 = xla_tuple %s3, %s4
  %s6 = sld [smem:[#allocation0]]
  $region103: #{spiking_layer_forward.1} parent=0
    _
  %s8 = ssub.s32 1, %s6
  %s9 = scalar_select 0, %s8, %s6
  $region1: #{spiking_layer_forward.1} parent=0
    #allocation3 [shape = 'u8[131072]{0}', space=vmem, size = 0x20000, scoped, tag = 'input window, operand 1']
    #allocation4 [shape = 'u8[16384]{0}', space=vmem, size = 0x4000, scoped, tag = 'input window, operand 2']
    #allocation5 [shape = 's32[2]{0}', space=sflag, size = 0x8, scoped, tag = 'scoped memory for spiking_layer_forward.1']
    #allocation6 [shape = 's32[2]{0}', space=sflag, size = 0x8, scoped, tag = 'scoped memory for spiking_layer_forward.1']
    #allocation7 [shape = 'u8[16384]{0}', space=vmem, size = 0x4000, scoped, tag = 'output window, operand 0']
    #allocation8 [shape = 'u8[16384]{0}', space=vmem, size = 0x4000, scoped, tag = 'output window, operand 1']
    #allocation9 [shape = 's32[2]{0}', space=sflag, size = 0x8, scoped, tag = 'scoped memory for spiking_layer_forward.1']
    %10 = vsyncpa [#allocation5], 0
    %s11 = scalar_lea.sflag [#allocation5], 1
    %12 = vsyncpa %s11, 0
    %13 = vsyncpa [#allocation6], 0
    %s14 = scalar_lea.sflag [#allocation6], 1
    %15 = vsyncpa %s14, 0
    %16 = vsyncpa [#allocation9], 0
    %s17 = scalar_lea.sflag [#allocation9], 1
    %18 = vsyncpa %s17, 0
    loop: start=0, step=1, limit=8
    $region2: #{spiking_layer_forward.1} parent=1 // loop_pre_header
      _
    $region3: #{spiking_layer_forward.1} parent=1 // loop_header
      %s20 = sphi 0, %s24
      %p21 = scmp.ge.s32.totalorder %s20, 8
      %s27 = sphi 0, %s46
      %s28 = sphi 0, %s42
      %s29 = sphi 0, %s38
      %s30 = sphi 0, %s27
      %s31 = sphi 0, %s28
      %s32 = sphi 0, %s29
      %s33 = sphi 0, %s30
      %s34 = sphi 0, %s31
      %s35 = sphi 0, %s32
      %s51 = sphi 0, %s53
      %s54 = sphi 0, %s51
      %s55 = sphi 0, %s54
      %s71 = sphi 0, %s55
      %s79 = sphi 0, %s81
      %s82 = sphi 0, %s79
      %s83 = sphi 0, %s82
      %s99 = sphi 0, %s83
      %s107 = sphi 0, %s109
      %s110 = sphi 0, %s107
      %s111 = sphi 0, %s110
      %s127 = sphi 0, %s111
      %s135 = sphi 0, %s137
      %s138 = sphi 0, %s135
      %s139 = sphi 0, %s138
      %s155 = sphi 0, %s139
      %s163 = sphi 0, %s165
      %s166 = sphi 0, %s163
      %s167 = sphi 0, %s166
      %s183 = sphi 0, %s167
    $region4: #{spiking_layer_forward.1} parent=1 // loop_header_branch
      %23 = sbr.rel (%p21) target = $region8
    $region5: #{spiking_layer_forward.1} parent=1 // loop_body
      %s25 = ssub.s32 %s20, 1
      %s26 = ssub.s32 %s20, 2
      %s36 = sadd.s32 1, %s29
      %p37 = scmp.ge.s32.totalorder %s36, 3
      %s38 = scalar_select %p37, 0, %s36
      %s39 = sadd.s32 1, %s28
      %s40 = scalar_select %p37, %s39, %s28
      %p41 = scmp.ge.s32.totalorder %s40, 2
      %s42 = scalar_select %p41, 0, %s40
      %s43 = sadd.s32 1, %s27
      %s44 = scalar_select %p41, %s43, %s27
      %p45 = scmp.ge.s32.totalorder %s44, 1
      %s46 = scalar_select %p45, 0, %s44
      %s47 = ssub.s32 %s27, %s46
      %s48 = ssub.s32 %s29, %s38
      %s49 = sor.u32 %s47, %s48
      %p50 = scmp.eq.s32.totalorder %s49, 0
      %s52 = sadd.s32 %s51, 1
      %s53 = scalar_select %p50, %s51, %s52
      %p56 = pneg %p50
      %p57 = scmp.eq.s32.totalorder %s20, 5
      %p58 = por %p56, %p57
      %p59 = scmp.ne.s32.totalorder %s51, %s54
      %p60 = scmp.eq.s32.totalorder %s20, 0
      %p61 = por %p59, %p60
      %p62 = scmp.ne.s32.totalorder %s51, %s54
      %p63 = scmp.eq.s32.totalorder %s25, 5
      %p64 = por %p62, %p63
      %p65 = scmp.ne.s32.totalorder %s54, %s55
      %p66 = scmp.eq.s32.totalorder %s25, 0
      %p67 = por %p65, %p66
      %p68 = scmp.ne.s32.totalorder %s54, %s55
      %p69 = scmp.eq.s32.totalorder %s26, 5
      %p70 = por %p68, %p69
      %p72 = scmp.ne.s32.totalorder %s55, %s71
      %p73 = scmp.eq.s32.totalorder %s26, 0
      %p74 = por %p72, %p73
      %s75 = ssub.s32 %s29, %s38
      %s76 = ssub.s32 %s28, %s42
      %s77 = sor.u32 %s75, %s76
      %p78 = scmp.eq.s32.totalorder %s77, 0
      %s80 = sadd.s32 %s79, 1
      %s81 = scalar_select %p78, %s79, %s80
      %p84 = pneg %p78
      %p85 = scmp.eq.s32.totalorder %s20, 5
      %p86 = por %p84, %p85
      %p87 = scmp.ne.s32.totalorder %s79, %s82
      %p88 = scmp.eq.s32.totalorder %s20, 0
      %p89 = por %p87, %p88
      %p90 = scmp.ne.s32.totalorder %s79, %s82
      %p91 = scmp.eq.s32.totalorder %s25, 5
      %p92 = por %p90, %p91
      %p93 = scmp.ne.s32.totalorder %s82, %s83
      %p94 = scmp.eq.s32.totalorder %s25, 0
      %p95 = por %p93, %p94
      %p96 = scmp.ne.s32.totalorder %s82, %s83
      %p97 = scmp.eq.s32.totalorder %s26, 5
      %p98 = por %p96, %p97
      %p100 = scmp.ne.s32.totalorder %s83, %s99
      %p101 = scmp.eq.s32.totalorder %s26, 0
      %p102 = por %p100, %p101
      %s103 = ssub.s32 %s27, %s46
      %s104 = ssub.s32 %s28, %s42
      %s105 = sor.u32 %s103, %s104
      %p106 = scmp.eq.s32.totalorder %s105, 0
      %s108 = sadd.s32 %s107, 1
      %s109 = scalar_select %p106, %s107, %s108
      %p112 = pneg %p106
      %p113 = scmp.eq.s32.totalorder %s20, 5
      %p114 = por %p112, %p113
      %p115 = scmp.ne.s32.totalorder %s107, %s110
      %p116 = scmp.eq.s32.totalorder %s20, 0
      %p117 = por %p115, %p116
      %p118 = scmp.ne.s32.totalorder %s107, %s110
      %p119 = scmp.eq.s32.totalorder %s25, 5
      %p120 = por %p118, %p119
      %p121 = scmp.ne.s32.totalorder %s110, %s111
      %p122 = scmp.eq.s32.totalorder %s25, 0
      %p123 = por %p121, %p122
      %p124 = scmp.ne.s32.totalorder %s110, %s111
      %p125 = scmp.eq.s32.totalorder %s26, 5
      %p126 = por %p124, %p125
      %p128 = scmp.ne.s32.totalorder %s111, %s127
      %p129 = scmp.eq.s32.totalorder %s26, 0
      %p130 = por %p128, %p129
      %s131 = ssub.s32 %s27, %s46
      %s132 = ssub.s32 %s28, %s42
      %s133 = sor.u32 %s131, %s132
      %p134 = scmp.eq.s32.totalorder %s133, 0
      %s136 = sadd.s32 %s135, 1
      %s137 = scalar_select %p134, %s135, %s136
      %p140 = pneg %p134
      %p141 = scmp.eq.s32.totalorder %s20, 5
      %p142 = por %p140, %p141
      %p143 = scmp.ne.s32.totalorder %s135, %s138
      %p144 = scmp.eq.s32.totalorder %s20, 0
      %p145 = por %p143, %p144
      %p146 = scmp.ne.s32.totalorder %s135, %s138
      %p147 = scmp.eq.s32.totalorder %s25, 5
      %p148 = por %p146, %p147
      %p149 = scmp.ne.s32.totalorder %s138, %s139
      %p150 = scmp.eq.s32.totalorder %s25, 0
      %p151 = por %p149, %p150
      %p152 = scmp.ne.s32.totalorder %s138, %s139
      %p153 = scmp.eq.s32.totalorder %s26, 5
      %p154 = por %p152, %p153
      %p156 = scmp.ne.s32.totalorder %s139, %s155
      %p157 = scmp.eq.s32.totalorder %s26, 0
      %p158 = por %p156, %p157
      %s159 = ssub.s32 %s27, %s46
      %s160 = ssub.s32 %s28, %s42
      %s161 = sor.u32 %s159, %s160
      %p162 = scmp.eq.s32.totalorder %s161, 0
      %s164 = sadd.s32 %s163, 1
      %s165 = scalar_select %p162, %s163, %s164
      %p168 = pneg %p162
      %p169 = scmp.eq.s32.totalorder %s20, 5
      %p170 = por %p168, %p169
      %p171 = scmp.ne.s32.totalorder %s163, %s166
      %p172 = scmp.eq.s32.totalorder %s20, 0
      %p173 = por %p171, %p172
      %p174 = scmp.ne.s32.totalorder %s163, %s166
      %p175 = scmp.eq.s32.totalorder %s25, 5
      %p176 = por %p174, %p175
      %p177 = scmp.ne.s32.totalorder %s166, %s167
      %p178 = scmp.eq.s32.totalorder %s25, 0
      %p179 = por %p177, %p178
      %p180 = scmp.ne.s32.totalorder %s166, %s167
      %p181 = scmp.eq.s32.totalorder %s26, 5
      %p182 = por %p180, %p181
      %p184 = scmp.ne.s32.totalorder %s167, %s183
      %p185 = scmp.eq.s32.totalorder %s26, 0
      %p186 = por %p184, %p185
      %p187 = scmp.le.s32.totalorder 1, %s20
      %p188 = scmp.lt.s32.totalorder %s20, 7
      %p189 = pnand %p187, %p188
      %p190 = pneg %p189
      // Predicated region
      $region9: #{spiking_layer_forward.1} parent=5 // pred_check
        _
      $region10: #{spiking_layer_forward.1} parent=5 // pred_check_branch
        %192 = sbr.rel (%p189) target = $region12
      $region11: #{spiking_layer_forward.1} parent=5 // pred_region
        %s193 = ssub.s32 %s20, 1
      $region12: #{spiking_layer_forward.1} parent=5 // pred_fallthru
        _
      %p194 = scmp.lt.s32.totalorder %s20, 6
      // Predicated region
      $region13: #{spiking_layer_forward.1} parent=5 // pred_check
        %p195 = pneg %p194
      $region14: #{spiking_layer_forward.1} parent=5 // pred_check_branch
        %197 = sbr.rel (%p195) target = $region16
      $region15: #{spiking_layer_forward.1} parent=5 // pred_region
        // Predicated region
        $region17: #{spiking_layer_forward.1} parent=15 // pred_check
          %p198 = pneg %p61
        $region18: #{spiking_layer_forward.1} parent=15 // pred_check_branch
          %200 = sbr.rel (%p198) target = $region20
        $region19: #{spiking_layer_forward.1} parent=15 // pred_region
          %p201 = scmp.lt.s32.totalorder %s27, 0
          %s202 = scalar_select %p201, %s27, 0
          %p203 = scmp.lt.s32.totalorder %s29, 2
          %s204 = scalar_select %p203, %s29, 2
          %s205 = smul.addr %s202, 3
          %s206 = sadd.s32 %s204, %s205
          %s207 = smul.addr %s206, 4
          %s208 = scalar_lea.vmem %s0, %s207
        $region20: #{spiking_layer_forward.1} parent=15 // pred_fallthru
          _
        // Predicated region
        $region21: #{spiking_layer_forward.1} parent=15 // pred_check
          %p209 = pneg %p89
        $region22: #{spiking_layer_forward.1} parent=15 // pred_check_branch
          %211 = sbr.rel (%p209) target = $region24
        $region23: #{spiking_layer_forward.1} parent=15 // pred_region
          %s212 = sand.u32 %s79, 1
          %s213 = sand.u32 %s79, 1
          %s214 = smul.addr %s213, 128
          %s215 = scalar_lea.vmem [#allocation3], %s214
          %s216 = smul.u32 16, %s29
          %s217 = smul.u32 2, %s28
          %s218 = smul.addr %s216, 4
          %s219 = sadd.s32 %s217, %s218
          %s220 = smul.addr %s219, 4
          %s221 = scalar_lea.vmem %s1, %s220
          // Predicated region
          $region25: #{spiking_layer_forward.1} parent=23 // pred_check
            _
          $region26: #{spiking_layer_forward.1} parent=23 // pred_check_branch
            %223 = sbr.rel (0) target = $region28
          $region27: #{spiking_layer_forward.1} parent=23 // pred_region
            // Predicated region
            $region29: #{spiking_layer_forward.1} parent=27 // pred_check
              _
            $region30: #{spiking_layer_forward.1} parent=27 // pred_check_branch
              %225 = sbr.rel (0) target = $region32
            $region31: #{spiking_layer_forward.1} parent=27 // pred_region
              // Predicated region
              $region44: #{spiking_layer_forward.1} parent=31 // pred_check
                _
              $region45: #{spiking_layer_forward.1} parent=31 // pred_check_branch
                %271 = sbr.rel (0) target = $region47
              $region46: #{spiking_layer_forward.1} parent=31 // pred_region
                loop: start=0, step=1, limit=1
                $region48: #{spiking_layer_forward.1} parent=46 // loop_pre_header
                  _
                $region49: #{spiking_layer_forward.1} parent=46 // loop_header
                  %s273 = sphi 0, %s277
                  %p274 = scmp.ge.s32.totalorder %s273, 1
                  %s278 = sphi %s221, %s221
                  %s279 = sphi %s215, %s215
                $region50: #{spiking_layer_forward.1} parent=46 // loop_header_branch
                  %276 = sbr.rel (%p274) target = $region54
                $region51: #{spiking_layer_forward.1} parent=46 // loop_body
                  %v280 = vld [vmem:[%s278] sm:$0xff]
                  %281 = vst [vmem:[%s279] sm:$0xff] %v280
                  %v282 = vld [vmem:[%s278 + $0x10] sm:$0xff]
                  %283 = vst [vmem:[%s279 + $0x8] sm:$0xff] %v282
                  %v284 = vld [vmem:[%s278 + $0x20] sm:$0xff]
                  %285 = vst [vmem:[%s279 + $0x10] sm:$0xff] %v284
                  %v286 = vld [vmem:[%s278 + $0x30] sm:$0xff]
                  %287 = vst [vmem:[%s279 + $0x18] sm:$0xff] %v286
                  %v288 = vld [vmem:[%s278 + $0x40] sm:$0xff]
                  %289 = vst [vmem:[%s279 + $0x20] sm:$0xff] %v288
                  %v290 = vld [vmem:[%s278 + $0x50] sm:$0xff]
                  %291 = vst [vmem:[%s279 + $0x28] sm:$0xff] %v290
                  %v292 = vld [vmem:[%s278 + $0x60] sm:$0xff]
                  %293 = vst [vmem:[%s279 + $0x30] sm:$0xff] %v292
                  %v294 = vld [vmem:[%s278 + $0x70] sm:$0xff]
                  %295 = vst [vmem:[%s279 + $0x38] sm:$0xff] %v294
                  %v296 = vld [vmem:[%s278 + $0x80] sm:$0xff]
                  %297 = vst [vmem:[%s279 + $0x40] sm:$0xff] %v296
                  %v298 = vld [vmem:[%s278 + $0x90] sm:$0xff]
                  %299 = vst [vmem:[%s279 + $0x48] sm:$0xff] %v298
                  %v300 = vld [vmem:[%s278 + $0xa0] sm:$0xff]
                  %301 = vst [vmem:[%s279 + $0x50] sm:$0xff] %v300
                  %v302 = vld [vmem:[%s278 + $0xb0] sm:$0xff]
                  %303 = vst [vmem:[%s279 + $0x58] sm:$0xff] %v302
                  %v304 = vld [vmem:[%s278 + $0xc0] sm:$0xff]
                  %305 = vst [vmem:[%s279 + $0x60] sm:$0xff] %v304
                  %v306 = vld [vmem:[%s278 + $0xd0] sm:$0xff]
                  %307 = vst [vmem:[%s279 + $0x68] sm:$0xff] %v306
                  %v308 = vld [vmem:[%s278 + $0xe0] sm:$0xff]
                  %309 = vst [vmem:[%s279 + $0x70] sm:$0xff] %v308
                  %v310 = vld [vmem:[%s278 + $0xf0] sm:$0xff]
                  %311 = vst [vmem:[%s279 + $0x78] sm:$0xff] %v310
                $region52: #{spiking_layer_forward.1} parent=46 // loop_footer
                  %s277 = sadd.s32 1, %s273
                $region53: #{spiking_layer_forward.1} parent=46 // loop_footer_branch
                  %272 = sbr.rel target = $region49
                $region54: #{spiking_layer_forward.1} parent=46 // loop_exit
                  _
              $region47: #{spiking_layer_forward.1} parent=31 // pred_fallthru
                _
              // Predicated region
              $region55: #{spiking_layer_forward.1} parent=31 // pred_check
                _
              $region56: #{spiking_layer_forward.1} parent=31 // pred_check_branch
                %313 = sbr.rel target = $region58
              $region57: #{spiking_layer_forward.1} parent=31 // pred_region
                _
              $region58: #{spiking_layer_forward.1} parent=31 // pred_fallthru
                _
            $region32: #{spiking_layer_forward.1} parent=27 // pred_fallthru
              _
            // Predicated region
            $region33: #{spiking_layer_forward.1} parent=27 // pred_check
              _
            $region34: #{spiking_layer_forward.1} parent=27 // pred_check_branch
              %227 = sbr.rel target = $region36
            $region35: #{spiking_layer_forward.1} parent=27 // pred_region
              %s229 = ssub.s32 256, 1
              loop: start=0, step=1, limit=1
              $region37: #{spiking_layer_forward.1} parent=35 // loop_pre_header
                _
              $region38: #{spiking_layer_forward.1} parent=35 // loop_header
                %s231 = sphi 0, %s235
                %p232 = scmp.ge.s32.totalorder %s231, 1
                %s236 = sphi %s221, %s221
                %s237 = sphi %s215, %s215
              $region39: #{spiking_layer_forward.1} parent=35 // loop_header_branch
                %234 = sbr.rel (%p232) target = $region43
              $region40: #{spiking_layer_forward.1} parent=35 // loop_body
                %v238 = vld [vmem:[%s236] sm:%s229]
                %239 = vst [vmem:[%s237] sm:%s229] %v238
                %v240 = vld [vmem:[%s236 + $0x10] sm:%s229]
                %241 = vst [vmem:[%s237 + $0x8] sm:%s229] %v240
                %v242 = vld [vmem:[%s236 + $0x20] sm:%s229]
                %243 = vst [vmem:[%s237 + $0x10] sm:%s229] %v242
                %v244 = vld [vmem:[%s236 + $0x30] sm:%s229]
                %245 = vst [vmem:[%s237 + $0x18] sm:%s229] %v244
                %v246 = vld [vmem:[%s236 + $0x40] sm:%s229]
                %247 = vst [vmem:[%s237 + $0x20] sm:%s229] %v246
                %v248 = vld [vmem:[%s236 + $0x50] sm:%s229]
                %249 = vst [vmem:[%s237 + $0x28] sm:%s229] %v248
                %v250 = vld [vmem:[%s236 + $0x60] sm:%s229]
                %251 = vst [vmem:[%s237 + $0x30] sm:%s229] %v250
                %v252 = vld [vmem:[%s236 + $0x70] sm:%s229]
                %253 = vst [vmem:[%s237 + $0x38] sm:%s229] %v252
                %v254 = vld [vmem:[%s236 + $0x80] sm:%s229]
                %255 = vst [vmem:[%s237 + $0x40] sm:%s229] %v254
                %v256 = vld [vmem:[%s236 + $0x90] sm:%s229]
                %257 = vst [vmem:[%s237 + $0x48] sm:%s229] %v256
                %v258 = vld [vmem:[%s236 + $0xa0] sm:%s229]
                %259 = vst [vmem:[%s237 + $0x50] sm:%s229] %v258
                %v260 = vld [vmem:[%s236 + $0xb0] sm:%s229]
                %261 = vst [vmem:[%s237 + $0x58] sm:%s229] %v260
                %v262 = vld [vmem:[%s236 + $0xc0] sm:%s229]
                %263 = vst [vmem:[%s237 + $0x60] sm:%s229] %v262
                %v264 = vld [vmem:[%s236 + $0xd0] sm:%s229]
                %265 = vst [vmem:[%s237 + $0x68] sm:%s229] %v264
                %v266 = vld [vmem:[%s236 + $0xe0] sm:%s229]
                %267 = vst [vmem:[%s237 + $0x70] sm:%s229] %v266
                %v268 = vld [vmem:[%s236 + $0xf0] sm:%s229]
                %269 = vst [vmem:[%s237 + $0x78] sm:%s229] %v268
              $region41: #{spiking_layer_forward.1} parent=35 // loop_footer
                %s235 = sadd.s32 1, %s231
              $region42: #{spiking_layer_forward.1} parent=35 // loop_footer_branch
                %230 = sbr.rel target = $region38
              $region43: #{spiking_layer_forward.1} parent=35 // loop_exit
                _
            $region36: #{spiking_layer_forward.1} parent=27 // pred_fallthru
              _
          $region28: #{spiking_layer_forward.1} parent=23 // pred_fallthru
            _
          %314 = vnop
        $region24: #{spiking_layer_forward.1} parent=15 // pred_fallthru
          _
        // Predicated region
        $region59: #{spiking_layer_forward.1} parent=15 // pred_check
          %p315 = pneg %p117
        $region60: #{spiking_layer_forward.1} parent=15 // pred_check_branch
          %317 = sbr.rel (%p315) target = $region62
        $region61: #{spiking_layer_forward.1} parent=15 // pred_region
          %s318 = sand.u32 %s107, 1
          %s319 = scalar_lea.sflag [#allocation5], %s318
          %s320 = sand.u32 %s107, 1
          %s321 = smul.addr %s320, 16
          %s322 = scalar_lea.vmem [#allocation4], %s321
          %s323 = smul.u32 2, %s28
          %325 = vsyncadd %s319, 0
          %s326 = smul.addr %s27, 4
          %s327 = sadd.s32 %s323, %s326
          %s328 = smul.addr %s327, 8
          %s329 = scalar_lea.hbm %s2, %s328
          %s331 = sshll.u32 %s329, 4
          %s332 = int_to_ptr.hbm [resolvable:$true] %s331
          %s333 = sshll.u32 %s322, 4
          %s334 = int_to_ptr.vmem [resolvable:$true] %s333
          %336 = dma.hbm_to_vmem [thread:$0]  %s332, 256, %s334, %s319
        $region62: #{spiking_layer_forward.1} parent=15 // pred_fallthru
          _
      $region16: #{spiking_layer_forward.1} parent=5 // pred_fallthru
        _
      %p337 = scmp.le.s32.totalorder 1, %s20
      %p338 = scmp.lt.s32.totalorder %s20, 7
      %p339 = pnand %p337, %p338
      %p340 = pneg %p339
      // Predicated region
      $region63: #{spiking_layer_forward.1} parent=5 // pred_check
        _
      $region64: #{spiking_layer_forward.1} parent=5 // pred_check_branch
        %342 = sbr.rel (%p339) target = $region66
      $region65: #{spiking_layer_forward.1} parent=5 // pred_region
        %s343 = ssub.s32 %s20, 1
        %s344 = sand.u32 %s82, 1
        %s345 = sand.u32 %s82, 1
        %s346 = smul.addr %s345, 128
        %s347 = scalar_lea.vmem [#allocation3], %s346
        // Predicated region
        $region67: #{spiking_layer_forward.1} parent=65 // pred_check
          %p348 = pneg %p95
        $region68: #{spiking_layer_forward.1} parent=65 // pred_check_branch
          %350 = sbr.rel (%p348) target = $region70
        $region69: #{spiking_layer_forward.1} parent=65 // pred_region
          _
        $region70: #{spiking_layer_forward.1} parent=65 // pred_fallthru
          _
        %s351 = sand.u32 %s110, 1
        %s352 = scalar_lea.sflag [#allocation5], %s351
        %s353 = sand.u32 %s110, 1
        %s354 = smul.addr %s353, 16
        %s355 = scalar_lea.vmem [#allocation4], %s354
        // Predicated region
        $region71: #{spiking_layer_forward.1} parent=65 // pred_check
          %p356 = pneg %p123
        $region72: #{spiking_layer_forward.1} parent=65 // pred_check_branch
          %358 = sbr.rel (%p356) target = $region74
        $region73: #{spiking_layer_forward.1} parent=65 // pred_region
          %360 = dma.done %s352, 256
        $region74: #{spiking_layer_forward.1} parent=65 // pred_fallthru
          _
        %p361 = scmp.lt.s32.totalorder %s30, 0
        %s362 = scalar_select %p361, %s30, 0
        %p363 = scmp.lt.s32.totalorder %s32, 2
        %s364 = scalar_select %p363, %s32, 2
        %s365 = smul.addr %s362, 3
        %s366 = sadd.s32 %s364, %s365
        %s367 = smul.addr %s366, 4
        %s368 = scalar_lea.vmem %s0, %s367
        %p369 = pneg %p67
        %p370 = pneg %p64
        %s371 = sand.u32 %s82, 1
        %s372 = sand.u32 %s82, 1
        %s373 = smul.addr %s372, 128
        %s374 = scalar_lea.vmem [#allocation3], %s373
        %p375 = pneg %p95
        %p376 = pneg %p92
        %s377 = sand.u32 %s110, 1
        %s378 = scalar_lea.sflag [#allocation5], %s377
        %s379 = sand.u32 %s110, 1
        %s380 = smul.addr %s379, 16
        %s381 = scalar_lea.vmem [#allocation4], %s380
        %p382 = pneg %p123
        %p383 = pneg %p120
        %p384 = pneg %p151
        %p385 = pneg %p148
        %s386 = sand.u32 %s138, 1
        %s387 = scalar_lea.sflag [#allocation6], %s386
        %s388 = sand.u32 %s138, 1
        %s389 = smul.addr %s388, 16
        %s390 = scalar_lea.vmem [#allocation7], %s389
        %p391 = pneg %p179
        %p392 = pneg %p176
        %s393 = sand.u32 %s166, 1
        %s394 = scalar_lea.sflag [#allocation9], %s393
        %s395 = sand.u32 %s166, 1
        %s396 = smul.addr %s395, 16
        %s397 = scalar_lea.vmem [#allocation8], %s396
        %p398 = scmp.lt.s32.totalorder %s30, 0
        %s399 = scalar_select %p398, %s30, 0
        %p400 = scmp.lt.s32.totalorder %s32, 2
        %s401 = scalar_select %p400, %s32, 2
        %s402 = smul.addr %s399, 3
        %s403 = sadd.s32 %s401, %s402
        %s404 = smul.addr %s403, 4
        %s405 = scalar_lea.vmem %s0, %s404
        %s406 = smul.u32 16, %s32
        %s407 = smul.u32 2, %s31
        %s408 = smul.u32 2, %s31
        %s409 = smul.u32 2, %s31
        %s410 = smul.u32 2, %s31
        %p411 = scmp.eq.s32.totalorder %s32, 0
        // Predicated region
        $region75: #{spiking_layer_forward.1} parent=65 // pred_check
          %p412 = pneg %p411
        $region76: #{spiking_layer_forward.1} parent=65 // pred_check_branch
          %414 = sbr.rel (%p412) target = $region78
        $region77: #{spiking_layer_forward.1} parent=65 // pred_region
          %415 = vst [vmem:[#allocation2] sm:$0xff] 0.0
          %416 = vst [vmem:[#allocation2 + $0x8] sm:$0xff] 0.0
        $region78: #{spiking_layer_forward.1} parent=65 // pred_fallthru
          _
        %v417 = vld [vmem:[#allocation2] sm:$0xff]
        %v418 = vld [vmem:[#allocation2 + $0x8] sm:$0xff]
        %v419 = vld [vmem:[%s405] sm:$0xf]
        %v420 = vld [vmem:[%s347] sm:$0xff]
        %v421 = vld [vmem:[%s347 + $0x8] sm:$0xff]
        %v422 = vld [vmem:[%s347 + $0x10] sm:$0xff]
        %v423 = vld [vmem:[%s347 + $0x18] sm:$0xff]
        %v424 = vld [vmem:[%s347 + $0x20] sm:$0xff]
        %v425 = vld [vmem:[%s347 + $0x28] sm:$0xff]
        %v426 = vld [vmem:[%s347 + $0x30] sm:$0xff]
        %v427 = vld [vmem:[%s347 + $0x38] sm:$0xff]
        %v428 = vld [vmem:[%s347 + $0x40] sm:$0xff]
        %v429 = vld [vmem:[%s347 + $0x48] sm:$0xff]
        %v430 = vld [vmem:[%s347 + $0x50] sm:$0xff]
        %v431 = vld [vmem:[%s347 + $0x58] sm:$0xff]
        %v432 = vld [vmem:[%s347 + $0x60] sm:$0xff]
        %v433 = vld [vmem:[%s347 + $0x68] sm:$0xff]
        %v434 = vld [vmem:[%s347 + $0x70] sm:$0xff]
        %v435 = vld [vmem:[%s347 + $0x78] sm:$0xff]
        %v452 = vunpack.c.l.b16 %v420
        %v453 = vunpack.c.h.b16 %v420
        %v454 = vunpack.c.l.b16 %v421
        %v455 = vunpack.c.h.b16 %v421
        %v456 = vunpack.c.l.b16 %v422
        %v457 = vunpack.c.h.b16 %v422
        %v458 = vunpack.c.l.b16 %v423
        %v459 = vunpack.c.h.b16 %v423
        %v460 = vunpack.c.l.b16 %v424
        %v461 = vunpack.c.h.b16 %v424
        %v462 = vunpack.c.l.b16 %v425
        %v463 = vunpack.c.h.b16 %v425
        %v464 = vunpack.c.l.b16 %v426
        %v465 = vunpack.c.h.b16 %v426
        %v466 = vunpack.c.l.b16 %v427
        %v467 = vunpack.c.h.b16 %v427
        %v468 = vunpack.c.l.b16 %v428
        %v469 = vunpack.c.h.b16 %v428
        %v470 = vunpack.c.l.b16 %v429
        %v471 = vunpack.c.h.b16 %v429
        %v472 = vunpack.c.l.b16 %v430
        %v473 = vunpack.c.h.b16 %v430
        %v474 = vunpack.c.l.b16 %v431
        %v475 = vunpack.c.h.b16 %v431
        %v476 = vunpack.c.l.b16 %v432
        %v477 = vunpack.c.h.b16 %v432
        %v478 = vunpack.c.l.b16 %v433
        %v479 = vunpack.c.h.b16 %v433
        %v480 = vunpack.c.l.b16 %v434
        %v481 = vunpack.c.h.b16 %v434
        %v482 = vunpack.c.l.b16 %v435
        %v483 = vunpack.c.h.b16 %v435
        %v484 = vpack.c.b16 %v454, %v452
        %v485 = vpack.c.b16 %v455, %v453
        %v486 = vpack.c.b16 %v458, %v456
        %v487 = vpack.c.b16 %v459, %v457
        %v488 = vpack.c.b16 %v462, %v460
        %v489 = vpack.c.b16 %v463, %v461
        %v490 = vpack.c.b16 %v466, %v464
        %v491 = vpack.c.b16 %v467, %v465
        %v492 = vpack.c.b16 %v470, %v468
        %v493 = vpack.c.b16 %v471, %v469
        %v494 = vpack.c.b16 %v474, %v472
        %v495 = vpack.c.b16 %v475, %v473
        %v496 = vpack.c.b16 %v478, %v476
        %v497 = vpack.c.b16 %v479, %v477
        %v498 = vpack.c.b16 %v482, %v480
        %v499 = vpack.c.b16 %v483, %v481
        %516 = vmatpush.bf16.msra.mxu0 %v498
        %517 = vmatpush.bf16.msra.mxu0 %v496
        %518 = vmatpush.bf16.msra.mxu0 %v494
        %519 = vmatpush.bf16.msra.mxu0 %v492
        %520 = vmatpush.bf16.msra.mxu0 %v490
        %521 = vmatpush.bf16.msra.mxu0 %v488
        %522 = vmatpush.bf16.msra.mxu0 %v486
        %523 = vmatpush.bf16.msra.mxu0 %v484
        %524 = vmatmul.bf16.gmra.mxu0 %v419
        %v525 = vpop.f32.mrf.mxu0
        %v526 = vadd.f32 0.0, %v525
        %v527 = vpop.f32.mrf.mxu0
        %528 = vdwg.mxu0
        %529 = vmatpush.bf16.msra.mxu0 %v499
        %530 = vmatpush.bf16.msra.mxu0 %v497
        %531 = vmatpush.bf16.msra.mxu0 %v495
        %532 = vmatpush.bf16.msra.mxu0 %v493
        %533 = vmatpush.bf16.msra.mxu0 %v491
        %534 = vmatpush.bf16.msra.mxu0 %v489
        %535 = vmatpush.bf16.msra.mxu0 %v487
        %536 = vmatpush.bf16.msra.mxu0 %v485
        %537 = vmatmul.bf16.gmra.mxu0 %v419
        %v538 = vpop.f32.mrf.mxu0
        %v539 = vadd.f32 0.0, %v538
        %v540 = vpop.f32.mrf.mxu0
        %541 = vdwg.mxu0
        %v542 = vadd.f32 %v417, %v526
        %v543 = vadd.f32 %v418, %v539
        %544 = vst [vmem:[#allocation2] sm:$0xff] %v542
        %545 = vst [vmem:[#allocation2 + $0x8] sm:$0xff] %v543
        %p546 = scmp.eq.s32.totalorder %s32, 2
        // Predicated region
        $region79: #{spiking_layer_forward.1} parent=65 // pred_check
          %p547 = pneg %p546
        $region80: #{spiking_layer_forward.1} parent=65 // pred_check_branch
          %549 = sbr.rel (%p547) target = $region82
        $region81: #{spiking_layer_forward.1} parent=65 // pred_region
          %v550 = vld [vmem:[%s355] sm:$0xff]
          %v551 = vld [vmem:[%s355 + $0x8] sm:$0xff]
          %v552 = vmul.f32 %v550, 0.9
          %v553 = vmul.f32 %v551, 0.9
          %v554 = vld [vmem:[#allocation2] sm:$0xff]
          %v555 = vld [vmem:[#allocation2 + $0x8] sm:$0xff]
          %v556 = vadd.f32 %v552, %v554
          %v557 = vadd.f32 %v553, %v555
          %vm558 = vcmp.ge.f32.partialorder %v556, 1.0
          %vm559 = vcmp.ge.f32.partialorder %v557, 1.0
          %v560 = vsel %vm558, 1.0, 0.0
          %v561 = vsel %vm559, 1.0, 0.0
          %562 = vst [vmem:[%s390] sm:$0xff] %v560
          %563 = vst [vmem:[%s390 + $0x8] sm:$0xff] %v561
          %v564 = vsub.f32 %v556, %v560
          %v565 = vsub.f32 %v557, %v561
          %566 = vst [vmem:[%s397] sm:$0xff] %v564
          %567 = vst [vmem:[%s397 + $0x8] sm:$0xff] %v565
        $region82: #{spiking_layer_forward.1} parent=65 // pred_fallthru
          _
        %s568 = sand.u32 %s138, 1
        %s569 = scalar_lea.sflag [#allocation6], %s568
        %s570 = sand.u32 %s138, 1
        %s571 = smul.addr %s570, 16
        %s572 = scalar_lea.vmem [#allocation7], %s571
        %s573 = sand.u32 %s166, 1
        %s574 = scalar_lea.sflag [#allocation9], %s573
        %s575 = sand.u32 %s166, 1
        %s576 = smul.addr %s575, 16
        %s577 = scalar_lea.vmem [#allocation8], %s576
        // Predicated region
        $region83: #{spiking_layer_forward.1} parent=65 // pred_check
          %p578 = pneg %p148
        $region84: #{spiking_layer_forward.1} parent=65 // pred_check_branch
          %580 = sbr.rel (%p578) target = $region86
        $region85: #{spiking_layer_forward.1} parent=65 // pred_region
          %s581 = smul.u32 2, %s31
          %583 = vsyncadd %s569, 0
          %s584 = smul.addr %s30, 4
          %s585 = sadd.s32 %s581, %s584
          %s586 = smul.addr %s585, 8
          %s587 = scalar_lea.hbm %s3, %s586
          %s589 = sshll.u32 %s572, 4
          %s590 = int_to_ptr.vmem [resolvable:$true] %s589
          %s591 = sshll.u32 %s587, 4
          %s592 = int_to_ptr.hbm [resolvable:$true] %s591
          %594 = dma.vmem_to_hbm [thread:$0]  %s590, 256, %s592, %s569
        $region86: #{spiking_layer_forward.1} parent=65 // pred_fallthru
          _
        // Predicated region
        $region87: #{spiking_layer_forward.1} parent=65 // pred_check
          %p595 = pneg %p176
        $region88: #{spiking_layer_forward.1} parent=65 // pred_check_branch
          %597 = sbr.rel (%p595) target = $region90
        $region89: #{spiking_layer_forward.1} parent=65 // pred_region
          %s598 = smul.u32 2, %s31
          %600 = vsyncadd %s574, 0
          %s601 = smul.addr %s30, 4
          %s602 = sadd.s32 %s598, %s601
          %s603 = smul.addr %s602, 8
          %s604 = scalar_lea.hbm %s4, %s603
          %s606 = sshll.u32 %s577, 4
          %s607 = int_to_ptr.vmem [resolvable:$true] %s606
          %s608 = sshll.u32 %s604, 4
          %s609 = int_to_ptr.hbm [resolvable:$true] %s608
          %611 = dma.vmem_to_hbm [thread:$0]  %s607, 256, %s609, %s574
        $region90: #{spiking_layer_forward.1} parent=65 // pred_fallthru
          _
      $region66: #{spiking_layer_forward.1} parent=5 // pred_fallthru
        _
      %p612 = scmp.le.s32.totalorder 2, %s20
      // Predicated region
      $region91: #{spiking_layer_forward.1} parent=5 // pred_check
        %p613 = pneg %p612
      $region92: #{spiking_layer_forward.1} parent=5 // pred_check_branch
        %615 = sbr.rel (%p613) target = $region94
      $region93: #{spiking_layer_forward.1} parent=5 // pred_region
        %s616 = ssub.s32 %s20, 2
        // Predicated region
        $region95: #{spiking_layer_forward.1} parent=93 // pred_check
          %p617 = pneg %p154
        $region96: #{spiking_layer_forward.1} parent=93 // pred_check_branch
          %619 = sbr.rel (%p617) target = $region98
        $region97: #{spiking_layer_forward.1} parent=93 // pred_region
          %s620 = sand.u32 %s139, 1
          %s621 = scalar_lea.sflag [#allocation6], %s620
          %s622 = sand.u32 %s139, 1
          %s623 = smul.addr %s622, 16
          %s624 = scalar_lea.vmem [#allocation7], %s623
          %626 = dma.done %s621, 256
        $region98: #{spiking_layer_forward.1} parent=93 // pred_fallthru
          _
        // Predicated region
        $region99: #{spiking_layer_forward.1} parent=93 // pred_check
          %p627 = pneg %p182
        $region100: #{spiking_layer_forward.1} parent=93 // pred_check_branch
          %629 = sbr.rel (%p627) target = $region102
        $region101: #{spiking_layer_forward.1} parent=93 // pred_region
          %s630 = sand.u32 %s167, 1
          %s631 = scalar_lea.sflag [#allocation9], %s630
          %s632 = sand.u32 %s167, 1
          %s633 = smul.addr %s632, 16
          %s634 = scalar_lea.vmem [#allocation8], %s633
          %636 = dma.done %s631, 256
        $region102: #{spiking_layer_forward.1} parent=93 // pred_fallthru
          _
      $region94: #{spiking_layer_forward.1} parent=5 // pred_fallthru
        _
    $region6: #{spiking_layer_forward.1} parent=1 // loop_footer
      %s24 = sadd.s32 1, %s20
    $region7: #{spiking_layer_forward.1} parent=1 // loop_footer_branch
      %19 = sbr.rel target = $region3
    $region8: #{spiking_layer_forward.1} parent=1 // loop_exit
      _
    %637 = vsyncpa [#allocation5], 1
    %s638 = scalar_lea.sflag [#allocation5], 1
    %639 = vsyncpa %s638, 1
    %640 = vsyncpa [#allocation6], 1
    %s641 = scalar_lea.sflag [#allocation6], 1
    %642 = vsyncpa %s641, 1
    %643 = vsyncpa [#allocation9], 1
    %s644 = scalar_lea.sflag [#allocation9], 1
    %645 = vsyncpa %s644, 1

</llo_original>
